<compile_context>
chip_gen: v6e
topology: v6e:2x2x1
jax: 0.10.0
libtpu: 0.0.40
codegen_flags: <defaults>
</compile_context>

<pallas_src>
import jax
import jax.numpy as jnp
from jax.experimental import pallas as pl
from jax.experimental.pallas import tpu as pltpu

LANE = 128


def sign_classifier_kernel(feat_ref, w1_ref, b1_ref, w2_ref, b2_ref, out_ref):
    # feat_ref: (TB, C, HW) possibly bf16 ; out_ref: (TB, NS_PAD) f32
    feat = feat_ref[...].astype(jnp.float32)            # upcast; accumulate mean in f32
    pooled = jnp.mean(feat, axis=-1)                     # AdaptiveAvgPool2d(1) -> (TB, C)
    h = jnp.dot(pooled, w1_ref[...],
                preferred_element_type=jnp.float32) + b1_ref[...]
    h = jnp.maximum(h, 0.0)                              # ReLU (Dropout = identity, inference)
    out_ref[...] = (jnp.dot(h, w2_ref[...],
                            preferred_element_type=jnp.float32) + b2_ref[...])


def _pick_batch_tile(B, C, HW, itemsize, budget_bytes=8 * 1024 * 1024):
    """Largest batch tile whose double-buffered feat slab fits the budget."""
    per_row = max(1, C * HW * itemsize)
    tb = max(1, budget_bytes // (2 * per_row))
    if tb >= B:
        return B
    # Output block's second-to-last dim is TB; keep it a multiple of 8 when partial.
    return max(8, (tb // 8) * 8)


def sign_classifier_forward(feat_nchw, params, *, interpret=False):
    """feat_nchw: (B, C, H, W) backbone feature map (PyTorch NCHW convention)."""
    w1, b1, w2, b2 = params
    B, C, H, W = feat_nchw.shape
    HW = H * W
    hidden = w1.shape[1]
    num_signs = w2.shape[1]
    ns_pad = pl.cdiv(num_signs, LANE) * LANE

    # Free reshape of the contiguous NCHW tensor -- no transpose pass over HBM.
    feat = feat_nchw.reshape(B, C, HW)

    # Lane-dense output: pad the tiny num_signs axis up to a multiple of 128.
    w1f = w1.astype(jnp.float32)
    b1f = b1.astype(jnp.float32)
    w2p = jnp.pad(w2.astype(jnp.float32), ((0, 0), (0, ns_pad - num_signs)))
    b2p = jnp.pad(b2.astype(jnp.float32), ((0, 0), (0, ns_pad - num_signs)))

    itemsize = jnp.dtype(feat.dtype).itemsize
    tb = _pick_batch_tile(B, C, HW, itemsize)
    grid = (pl.cdiv(B, tb),)

    feat_bytes = B * C * HW * itemsize
    weight_bytes = 4 * (w1f.size + b1f.size + w2p.size + b2p.size)
    out_bytes = 4 * B * ns_pad
    cost = pl.CostEstimate(
        flops=2 * B * C * hidden + 2 * B * hidden * ns_pad + B * C * HW,
        transcendentals=0,
        bytes_accessed=feat_bytes + weight_bytes + out_bytes,
    )

    # Double-buffered feat tile + (double-buffered) resident weights + outputs.
    vmem_need = (2 * tb * C * HW * itemsize
                 + 2 * weight_bytes
                 + 2 * tb * ns_pad * 4)
    vmem_limit = int(min(48 * 1024 * 1024, max(2 * vmem_need, 16 * 1024 * 1024)))

    out_padded = pl.pallas_call(
        sign_classifier_kernel,
        out_shape=jax.ShapeDtypeStruct((B, ns_pad), jnp.float32),
        grid=grid,
        in_specs=[
            pl.BlockSpec((tb, C, HW), lambda b: (b, 0, 0)),      # feat batch tile
            pl.BlockSpec((C, hidden), lambda b: (0, 0)),         # w1 (resident)
            pl.BlockSpec((1, hidden), lambda b: (0, 0)),         # b1
            pl.BlockSpec((hidden, ns_pad), lambda b: (0, 0)),    # w2 (lane-padded)
            pl.BlockSpec((1, ns_pad), lambda b: (0, 0)),         # b2 (lane-padded)
        ],
        out_specs=pl.BlockSpec((tb, ns_pad), lambda b: (b, 0)),
        compiler_params=pltpu.CompilerParams(
            dimension_semantics=("parallel",),
            vmem_limit_bytes=vmem_limit,
        ),
        cost_estimate=cost,
        interpret=interpret,
    )(feat, w1f, b1f, w2p, b2p)

    return out_padded[:, :num_signs]


def init_params(key, feature_dim, num_signs, hidden=512):
    """Deterministic synthetic parameters. Weights stored as (in, out)."""
    def lin(k, fan_in, fan_out):
        kw, kb = jax.random.split(k)
        scale = 1.0 / jnp.sqrt(fan_in)
        w = jax.random.uniform(kw, (fan_in, fan_out), jnp.float32, -scale, scale)
        b = jax.random.uniform(kb, (1, fan_out), jnp.float32, -scale, scale)
        return w, b

    ks = jax.random.split(key, 2)
    w1, b1 = lin(ks[0], feature_dim, hidden)      # Linear(feature_dim, 512)
    w2, b2 = lin(ks[1], hidden, num_signs)        # Linear(512, num_signs)
    return (w1, b1, w2, b2)


def reference_forward(feat_nchw, params):
    """Pure-JAX reference for correctness check."""
    w1, b1, w2, b2 = params
    x = feat_nchw.astype(jnp.float32)
    pooled = jnp.mean(x.reshape(x.shape[0], x.shape[1], -1), axis=-1)   # (B, C)
    h = jnp.maximum(pooled @ w1 + b1, 0.0)
    return h @ w2 + b2


if __name__ == "__main__":
    # Small, deterministic shapes: batch=2, feature_dim=128 (stand-in for the
    # backbone's 1024), spatial 8x8, num_signs=10.
    key = jax.random.PRNGKey(0)
    k_feat, k_params = jax.random.split(key)

    B, C, H, W = 2, 128, 8, 8
    NUM_SIGNS = 10

    # Backbone feature map, fed to the head in bf16 (halves the dominant HBM cost).
    feat_nchw = jax.random.normal(k_feat, (B, C, H, W), jnp.float32).astype(jnp.bfloat16)
    params = init_params(k_params, C, NUM_SIGNS)

    sign_logits = sign_classifier_forward(feat_nchw, params)
    jax.block_until_ready(sign_logits)

    ref_sign = reference_forward(feat_nchw, params)
    assert sign_logits.shape == (B, NUM_SIGNS)
    assert jnp.allclose(sign_logits, ref_sign, atol=2e-3, rtol=2e-3), (
        float(jnp.max(jnp.abs(sign_logits - ref_sign))))

    print("KERNEL_OK")
</pallas_src>

<mosaic_0001>
module attributes {stable_mosaic.version = 11 : i64} {
  func.func @sign_classifier_kernel(%arg0: i32, %arg1: memref<2x128x64xbf16, #tpu.memory_space<vmem>>, %arg2: memref<128x512xf32, #tpu.memory_space<vmem>>, %arg3: memref<1x512xf32, #tpu.memory_space<vmem>>, %arg4: memref<512x128xf32, #tpu.memory_space<vmem>>, %arg5: memref<1x128xf32, #tpu.memory_space<vmem>>, %arg6: memref<2x128xf32, #tpu.memory_space<vmem>>) attributes {dimension_semantics = [#tpu.dimension_semantics<parallel>], iteration_bounds = array<i64: 1>, scalar_prefetch = 0 : i64, scratch_operands = 0 : i64, tpu.core_type = #tpu.core_type<tc>, window_params = [{transform_indices = @transform_0, window_bounds = array<i64: 2, 128, 64>}, {pipeline_mode = #tpu.pipeline_mode<synchronous>, transform_indices = @transform_1, window_bounds = array<i64: 128, 512>}, {pipeline_mode = #tpu.pipeline_mode<synchronous>, transform_indices = @transform_2, window_bounds = array<i64: 1, 512>}, {pipeline_mode = #tpu.pipeline_mode<synchronous>, transform_indices = @transform_3, window_bounds = array<i64: 512, 128>}, {pipeline_mode = #tpu.pipeline_mode<synchronous>, transform_indices = @transform_4, window_bounds = array<i64: 1, 128>}, {transform_indices = @transform_5, window_bounds = array<i64: 2, 128>}]} {
    %c0 = arith.constant 0 : index
    %c0_0 = arith.constant 0 : index
    %c0_1 = arith.constant 0 : index
    %0 = vector.load %arg1[%c0, %c0_0, %c0_1] : memref<2x128x64xbf16, #tpu.memory_space<vmem>>, vector<2x128x64xbf16>
    %1 = arith.extf %0 : vector<2x128x64xbf16> to vector<2x128x64xf32>
    %cst = arith.constant dense<0.000000e+00> : vector<2x128xf32>
    %2 = vector.multi_reduction <add>, %1, %cst [2] : vector<2x128x64xf32> to vector<2x128xf32>
    %cst_2 = arith.constant 6.400000e+01 : f32
    %3 = vector.broadcast %cst_2 : f32 to vector<2x128xf32>
    %4 = arith.divf %2, %3 : vector<2x128xf32>
    %c0_3 = arith.constant 0 : index
    %c0_4 = arith.constant 0 : index
    %5 = vector.load %arg2[%c0_3, %c0_4] : memref<128x512xf32, #tpu.memory_space<vmem>>, vector<128x512xf32>
    %cst_5 = arith.constant dense<0.000000e+00> : vector<2x512xf32>
    %6 = tpu.matmul %4, %5, %cst_5 {dimension_numbers = #tpu.dot_dimension_numbers<[1], [0], [0], [1], [0, 0, 1, 1], [], []>} : vector<2x128xf32>, vector<128x512xf32>, vector<2x512xf32> -> vector<2x512xf32>
    %c0_6 = arith.constant 0 : index
    %c0_7 = arith.constant 0 : index
    %7 = vector.load %arg3[%c0_6, %c0_7] : memref<1x512xf32, #tpu.memory_space<vmem>>, vector<1x512xf32>
    %8 = vector.broadcast %7 : vector<1x512xf32> to vector<2x512xf32>
    %9 = arith.addf %6, %8 : vector<2x512xf32>
    %cst_8 = arith.constant 0.000000e+00 : f32
    %10 = vector.broadcast %cst_8 : f32 to vector<2x512xf32>
    %11 = arith.maximumf %9, %10 : vector<2x512xf32>
    %c0_9 = arith.constant 0 : index
    %c0_10 = arith.constant 0 : index
    %12 = vector.load %arg4[%c0_9, %c0_10] : memref<512x128xf32, #tpu.memory_space<vmem>>, vector<512x128xf32>
    %cst_11 = arith.constant dense<0.000000e+00> : vector<2x128xf32>
    %13 = tpu.matmul %11, %12, %cst_11 {dimension_numbers = #tpu.dot_dimension_numbers<[1], [0], [0], [1], [0, 0, 1, 1], [], []>} : vector<2x512xf32>, vector<512x128xf32>, vector<2x128xf32> -> vector<2x128xf32>
    %c0_12 = arith.constant 0 : index
    %c0_13 = arith.constant 0 : index
    %14 = vector.load %arg5[%c0_12, %c0_13] : memref<1x128xf32, #tpu.memory_space<vmem>>, vector<1x128xf32>
    %15 = vector.broadcast %14 : vector<1x128xf32> to vector<2x128xf32>
    %16 = arith.addf %13, %15 : vector<2x128xf32>
    %c0_14 = arith.constant 0 : index
    %c0_15 = arith.constant 0 : index
    %17 = vector.load %arg6[%c0_14, %c0_15] : memref<2x128xf32, #tpu.memory_space<vmem>>, vector<2x128xf32>
    tpu.vector_store %arg6[%c0_14, %c0_15], %16 {strides = array<i32>} : memref<2x128xf32, #tpu.memory_space<vmem>>, vector<2x128xf32>,
    return
  }
  func.func @transform_0(%arg0: i32) -> (i32, i32, i32) {
    %c0_i32 = arith.constant 0 : i32
    %c0_i32_0 = arith.constant 0 : i32
    %c0_i32_1 = arith.constant 0 : i32
    return %arg0, %c0_i32, %c0_i32_0 : i32, i32, i32
  }
  func.func @transform_1(%arg0: i32) -> (i32, i32) {
    %c0_i32 = arith.constant 0 : i32
    %c0_i32_0 = arith.constant 0 : i32
    %c0_i32_1 = arith.constant 0 : i32
    return %c0_i32, %c0_i32_0 : i32, i32
  }
  func.func @transform_2(%arg0: i32) -> (i32, i32) {
    %c0_i32 = arith.constant 0 : i32
    %c0_i32_0 = arith.constant 0 : i32
    %c0_i32_1 = arith.constant 0 : i32
    return %c0_i32, %c0_i32_0 : i32, i32
  }
  func.func @transform_3(%arg0: i32) -> (i32, i32) {
    %c0_i32 = arith.constant 0 : i32
    %c0_i32_0 = arith.constant 0 : i32
    %c0_i32_1 = arith.constant 0 : i32
    return %c0_i32, %c0_i32_0 : i32, i32
  }
  func.func @transform_4(%arg0: i32) -> (i32, i32) {
    %c0_i32 = arith.constant 0 : i32
    %c0_i32_0 = arith.constant 0 : i32
    %c0_i32_1 = arith.constant 0 : i32
    return %c0_i32, %c0_i32_0 : i32, i32
  }
  func.func @transform_5(%arg0: i32) -> (i32, i32) {
    %c0_i32 = arith.constant 0 : i32
    %c0_i32_0 = arith.constant 0 : i32
    return %arg0, %c0_i32 : i32, i32
  }
}

</mosaic_0001>

<llo_original>
// kernel: tpu_custom_call.1
$region0: #{tpu_custom_call.1}
  #allocation0 [shape = 'u32[]', space=smem, size = 0x4, offset = 0x4, fixed_abs, tag = 'smem constant byte address 0x4 - core index']
  #allocation1 [shape = 'u32[144,128]{1,0:T(1,128)}', space=vmem, size = 0x12000, scoped, tag = 'internal scratch']
  %s0 = inlined_call_operand.vmem [shape: bf16[2,128,64], index: 0, kind: input, shape index: {}]
  %s1 = inlined_call_operand.hbm [shape: f32[128,512], index: 1, kind: input, shape index: {}]
  %s2 = inlined_call_operand.vmem [shape: f32[1,512], index: 2, kind: input, shape index: {}]
  %s3 = inlined_call_operand.hbm [shape: f32[512,128], index: 3, kind: input, shape index: {}]
  %s4 = inlined_call_operand.vmem [shape: f32[1,128], index: 4, kind: input, shape index: {}]
  %s5 = inlined_call_operand.hbm [shape: f32[2,128], index: 5, kind: output, shape index: {}]
  %s6 = sld [smem:[#allocation0]]
  $region38: #{tpu_custom_call.1} parent=0
    _
  %s8 = ssub.s32 1, %s6
  %s9 = scalar_select 0, %s8, %s6
  $region1: #{tpu_custom_call.1} parent=0
    #allocation2 [shape = 'u8[262144]{0}', space=vmem, size = 0x40000, scoped, tag = 'input window, operand 1, single buffered']
    #allocation3 [shape = 's32[1]{0}', space=sflag, size = 0x4, scoped, tag = 'scoped memory for tpu_custom_call.1']
    #allocation4 [shape = 's32[1]{0}', space=sflag, size = 0x4, scoped, tag = 'scoped memory for tpu_custom_call.1']
    #allocation5 [shape = 'u8[262144]{0}', space=vmem, size = 0x40000, scoped, tag = 'input window, operand 3, single buffered']
    #allocation6 [shape = 's32[1]{0}', space=sflag, size = 0x4, scoped, tag = 'scoped memory for tpu_custom_call.1']
    #allocation7 [shape = 'u8[1024]{0}', space=vmem, size = 0x400, scoped, tag = 'output window, operand 0, single buffered']
    %10 = vsyncpa [#allocation3], 0
    %11 = vsyncpa [#allocation6], 0
    %12 = vsyncpa [#allocation4], 0
    // Predicated region
    $region2: #{tpu_custom_call.1} parent=1 // pred_check
      _
    $region3: #{tpu_custom_call.1} parent=1 // pred_check_branch
      %14 = sbr.rel (0) target = $region5
    $region4: #{tpu_custom_call.1} parent=1 // pred_region
      _
    $region5: #{tpu_custom_call.1} parent=1 // pred_fallthru
      _
    // Predicated region
    $region6: #{tpu_custom_call.1} parent=1 // pred_check
      _
    $region7: #{tpu_custom_call.1} parent=1 // pred_check_branch
      %16 = sbr.rel (0) target = $region9
    $region8: #{tpu_custom_call.1} parent=1 // pred_region
      %s18 = ssub.s32 8192, 8192
      %19 = vsyncadd [#allocation3], %s18
      %s20 = sshll.u32 [#allocation2], 4
      %s21 = int_to_ptr.vmem [resolvable:$true] %s20
      %26 = dma.hbm_to_vmem [thread:$0]  %s1, 8192, %s21, [#allocation3], 512, 512, 32
    $region9: #{tpu_custom_call.1} parent=1 // pred_fallthru
      _
    // Predicated region
    $region10: #{tpu_custom_call.1} parent=1 // pred_check
      _
    $region11: #{tpu_custom_call.1} parent=1 // pred_check_branch
      %28 = sbr.rel (0) target = $region13
    $region12: #{tpu_custom_call.1} parent=1 // pred_region
      _
    $region13: #{tpu_custom_call.1} parent=1 // pred_fallthru
      _
    // Predicated region
    $region14: #{tpu_custom_call.1} parent=1 // pred_check
      _
    $region15: #{tpu_custom_call.1} parent=1 // pred_check_branch
      %30 = sbr.rel (0) target = $region17
    $region16: #{tpu_custom_call.1} parent=1 // pred_region
      %s32 = ssub.s32 8192, 8192
      %33 = vsyncadd [#allocation6], %s32
      %s34 = sshll.u32 [#allocation5], 4
      %s35 = int_to_ptr.vmem [resolvable:$true] %s34
      %40 = dma.hbm_to_vmem [thread:$0]  %s3, 8192, %s35, [#allocation6], 128, 128, 8
    $region17: #{tpu_custom_call.1} parent=1 // pred_fallthru
      _
    // Predicated region
    $region18: #{tpu_custom_call.1} parent=1 // pred_check
      _
    $region19: #{tpu_custom_call.1} parent=1 // pred_check_branch
      %42 = sbr.rel (0) target = $region21
    $region20: #{tpu_custom_call.1} parent=1 // pred_region
      _
    $region21: #{tpu_custom_call.1} parent=1 // pred_fallthru
      _
    // Predicated region
    $region22: #{tpu_custom_call.1} parent=1 // pred_check
      _
    $region23: #{tpu_custom_call.1} parent=1 // pred_check_branch
      %44 = sbr.rel (0) target = $region25
    $region24: #{tpu_custom_call.1} parent=1 // pred_region
      %45 = dma.done [#allocation3], 8192
    $region25: #{tpu_custom_call.1} parent=1 // pred_fallthru
      _
    // Predicated region
    $region26: #{tpu_custom_call.1} parent=1 // pred_check
      _
    $region27: #{tpu_custom_call.1} parent=1 // pred_check_branch
      %47 = sbr.rel (0) target = $region29
    $region28: #{tpu_custom_call.1} parent=1 // pred_region
      %48 = dma.done [#allocation6], 8192
    $region29: #{tpu_custom_call.1} parent=1 // pred_fallthru
      _
    %v49 = vld [vmem:[%s0] sm:$0xf]
    %v50 = vld [vmem:[%s0 + $0x4] sm:$0xf]
    %v51 = vld [vmem:[%s0 + $0x8] sm:$0xf]
    %v52 = vld [vmem:[%s0 + $0xc] sm:$0xf]
    %v53 = vld [vmem:[%s0 + $0x10] sm:$0xf]
    %v54 = vld [vmem:[%s0 + $0x14] sm:$0xf]
    %v55 = vld [vmem:[%s0 + $0x18] sm:$0xf]
    %v56 = vld [vmem:[%s0 + $0x1c] sm:$0xf]
    %v57 = vld [vmem:[%s0 + $0x20] sm:$0xf]
    %v58 = vld [vmem:[%s0 + $0x24] sm:$0xf]
    %v59 = vld [vmem:[%s0 + $0x28] sm:$0xf]
    %v60 = vld [vmem:[%s0 + $0x2c] sm:$0xf]
    %v61 = vld [vmem:[%s0 + $0x30] sm:$0xf]
    %v62 = vld [vmem:[%s0 + $0x34] sm:$0xf]
    %v63 = vld [vmem:[%s0 + $0x38] sm:$0xf]
    %v64 = vld [vmem:[%s0 + $0x3c] sm:$0xf]
    %v65 = vld [vmem:[%s0 + $0x40] sm:$0xf]
    %v66 = vld [vmem:[%s0 + $0x44] sm:$0xf]
    %v67 = vld [vmem:[%s0 + $0x48] sm:$0xf]
    %v68 = vld [vmem:[%s0 + $0x4c] sm:$0xf]
    %v69 = vld [vmem:[%s0 + $0x50] sm:$0xf]
    %v70 = vld [vmem:[%s0 + $0x54] sm:$0xf]
    %v71 = vld [vmem:[%s0 + $0x58] sm:$0xf]
    %v72 = vld [vmem:[%s0 + $0x5c] sm:$0xf]
    %v73 = vld [vmem:[%s0 + $0x60] sm:$0xf]
    %v74 = vld [vmem:[%s0 + $0x64] sm:$0xf]
    %v75 = vld [vmem:[%s0 + $0x68] sm:$0xf]
    %v76 = vld [vmem:[%s0 + $0x6c] sm:$0xf]
    %v77 = vld [vmem:[%s0 + $0x70] sm:$0xf]
    %v78 = vld [vmem:[%s0 + $0x74] sm:$0xf]
    %v79 = vld [vmem:[%s0 + $0x78] sm:$0xf]
    %v80 = vld [vmem:[%s0 + $0x7c] sm:$0xf]
    %v81 = vunpack.c.l.bf16 %v49
    %v82 = vunpack.c.l.bf16 %v50
    %v83 = vunpack.c.l.bf16 %v51
    %v84 = vunpack.c.l.bf16 %v52
    %v85 = vunpack.c.l.bf16 %v53
    %v86 = vunpack.c.l.bf16 %v54
    %v87 = vunpack.c.l.bf16 %v55
    %v88 = vunpack.c.l.bf16 %v56
    %v89 = vunpack.c.l.bf16 %v57
    %v90 = vunpack.c.l.bf16 %v58
    %v91 = vunpack.c.l.bf16 %v59
    %v92 = vunpack.c.l.bf16 %v60
    %v93 = vunpack.c.l.bf16 %v61
    %v94 = vunpack.c.l.bf16 %v62
    %v95 = vunpack.c.l.bf16 %v63
    %v96 = vunpack.c.l.bf16 %v64
    %v97 = vunpack.c.l.bf16 %v65
    %v98 = vunpack.c.l.bf16 %v66
    %v99 = vunpack.c.l.bf16 %v67
    %v100 = vunpack.c.l.bf16 %v68
    %v101 = vunpack.c.l.bf16 %v69
    %v102 = vunpack.c.l.bf16 %v70
    %v103 = vunpack.c.l.bf16 %v71
    %v104 = vunpack.c.l.bf16 %v72
    %v105 = vunpack.c.l.bf16 %v73
    %v106 = vunpack.c.l.bf16 %v74
    %v107 = vunpack.c.l.bf16 %v75
    %v108 = vunpack.c.l.bf16 %v76
    %v109 = vunpack.c.l.bf16 %v77
    %v110 = vunpack.c.l.bf16 %v78
    %v111 = vunpack.c.l.bf16 %v79
    %v112 = vunpack.c.l.bf16 %v80
    %vm113 = vcmask 523264
    %v114 = vsel %vm113, %v81, 0.0
    %115 = vadd.xlane.f32.xlu0 %v114
    %v116 = vpop.xlane.xlu0 %115
    %v117 = vsel %vm113, %v82, 0.0
    %118 = vadd.xlane.f32.xlu0 %v117
    %v119 = vpop.xlane.xlu0 %118
    %v120 = vsel %vm113, %v83, 0.0
    %121 = vadd.xlane.f32.xlu0 %v120
    %v122 = vpop.xlane.xlu0 %121
    %v123 = vsel %vm113, %v84, 0.0
    %124 = vadd.xlane.f32.xlu0 %v123
    %v125 = vpop.xlane.xlu0 %124
    %v126 = vsel %vm113, %v85, 0.0
    %127 = vadd.xlane.f32.xlu0 %v126
    %v128 = vpop.xlane.xlu0 %127
    %v129 = vsel %vm113, %v86, 0.0
    %130 = vadd.xlane.f32.xlu0 %v129
    %v131 = vpop.xlane.xlu0 %130
    %v132 = vsel %vm113, %v87, 0.0
    %133 = vadd.xlane.f32.xlu0 %v132
    %v134 = vpop.xlane.xlu0 %133
    %v135 = vsel %vm113, %v88, 0.0
    %136 = vadd.xlane.f32.xlu0 %v135
    %v137 = vpop.xlane.xlu0 %136
    %v138 = vsel %vm113, %v89, 0.0
    %139 = vadd.xlane.f32.xlu0 %v138
    %v140 = vpop.xlane.xlu0 %139
    %v141 = vsel %vm113, %v90, 0.0
    %142 = vadd.xlane.f32.xlu0 %v141
    %v143 = vpop.xlane.xlu0 %142
    %v144 = vsel %vm113, %v91, 0.0
    %145 = vadd.xlane.f32.xlu0 %v144
    %v146 = vpop.xlane.xlu0 %145
    %v147 = vsel %vm113, %v92, 0.0
    %148 = vadd.xlane.f32.xlu0 %v147
    %v149 = vpop.xlane.xlu0 %148
    %v150 = vsel %vm113, %v93, 0.0
    %151 = vadd.xlane.f32.xlu0 %v150
    %v152 = vpop.xlane.xlu0 %151
    %v153 = vsel %vm113, %v94, 0.0
    %154 = vadd.xlane.f32.xlu0 %v153
    %v155 = vpop.xlane.xlu0 %154
    %v156 = vsel %vm113, %v95, 0.0
    %157 = vadd.xlane.f32.xlu0 %v156
    %v158 = vpop.xlane.xlu0 %157
    %v159 = vsel %vm113, %v96, 0.0
    %160 = vadd.xlane.f32.xlu0 %v159
    %v161 = vpop.xlane.xlu0 %160
    %v162 = vsel %vm113, %v97, 0.0
    %163 = vadd.xlane.f32.xlu0 %v162
    %v164 = vpop.xlane.xlu0 %163
    %v165 = vsel %vm113, %v98, 0.0
    %166 = vadd.xlane.f32.xlu0 %v165
    %v167 = vpop.xlane.xlu0 %166
    %v168 = vsel %vm113, %v99, 0.0
    %169 = vadd.xlane.f32.xlu0 %v168
    %v170 = vpop.xlane.xlu0 %169
    %v171 = vsel %vm113, %v100, 0.0
    %172 = vadd.xlane.f32.xlu0 %v171
    %v173 = vpop.xlane.xlu0 %172
    %v174 = vsel %vm113, %v101, 0.0
    %175 = vadd.xlane.f32.xlu0 %v174
    %v176 = vpop.xlane.xlu0 %175
    %v177 = vsel %vm113, %v102, 0.0
    %178 = vadd.xlane.f32.xlu0 %v177
    %v179 = vpop.xlane.xlu0 %178
    %v180 = vsel %vm113, %v103, 0.0
    %181 = vadd.xlane.f32.xlu0 %v180
    %v182 = vpop.xlane.xlu0 %181
    %v183 = vsel %vm113, %v104, 0.0
    %184 = vadd.xlane.f32.xlu0 %v183
    %v185 = vpop.xlane.xlu0 %184
    %v186 = vsel %vm113, %v105, 0.0
    %187 = vadd.xlane.f32.xlu0 %v186
    %v188 = vpop.xlane.xlu0 %187
    %v189 = vsel %vm113, %v106, 0.0
    %190 = vadd.xlane.f32.xlu0 %v189
    %v191 = vpop.xlane.xlu0 %190
    %v192 = vsel %vm113, %v107, 0.0
    %193 = vadd.xlane.f32.xlu0 %v192
    %v194 = vpop.xlane.xlu0 %193
    %v195 = vsel %vm113, %v108, 0.0
    %196 = vadd.xlane.f32.xlu0 %v195
    %v197 = vpop.xlane.xlu0 %196
    %v198 = vsel %vm113, %v109, 0.0
    %199 = vadd.xlane.f32.xlu0 %v198
    %v200 = vpop.xlane.xlu0 %199
    %v201 = vsel %vm113, %v110, 0.0
    %202 = vadd.xlane.f32.xlu0 %v201
    %v203 = vpop.xlane.xlu0 %202
    %v204 = vsel %vm113, %v111, 0.0
    %205 = vadd.xlane.f32.xlu0 %v204
    %v206 = vpop.xlane.xlu0 %205
    %v207 = vsel %vm113, %v112, 0.0
    %208 = vadd.xlane.f32.xlu0 %v207
    %v209 = vpop.xlane.xlu0 %208
    %v210 = vrcp.pop 64.0
    %v211 = vmul.f32 %v116, %v210
    %v212 = vmul.f32 %v119, %v210
    %v213 = vmul.f32 %v122, %v210
    %v214 = vmul.f32 %v125, %v210
    %v215 = vmul.f32 %v128, %v210
    %v216 = vmul.f32 %v131, %v210
    %v217 = vmul.f32 %v134, %v210
    %v218 = vmul.f32 %v137, %v210
    %v219 = vmul.f32 %v140, %v210
    %v220 = vmul.f32 %v143, %v210
    %v221 = vmul.f32 %v146, %v210
    %v222 = vmul.f32 %v149, %v210
    %v223 = vmul.f32 %v152, %v210
    %v224 = vmul.f32 %v155, %v210
    %v225 = vmul.f32 %v158, %v210
    %v226 = vmul.f32 %v161, %v210
    %v227 = vmul.f32 %v164, %v210
    %v228 = vmul.f32 %v167, %v210
    %v229 = vmul.f32 %v170, %v210
    %v230 = vmul.f32 %v173, %v210
    %v231 = vmul.f32 %v176, %v210
    %v232 = vmul.f32 %v179, %v210
    %v233 = vmul.f32 %v182, %v210
    %v234 = vmul.f32 %v185, %v210
    %v235 = vmul.f32 %v188, %v210
    %v236 = vmul.f32 %v191, %v210
    %v237 = vmul.f32 %v194, %v210
    %v238 = vmul.f32 %v197, %v210
    %v239 = vmul.f32 %v200, %v210
    %v240 = vmul.f32 %v203, %v210
    %v241 = vmul.f32 %v206, %v210
    %v242 = vmul.f32 %v209, %v210
    %v243 = vld [vmem:[#allocation2] sm:$0xff]
    %v244 = vld [vmem:[#allocation2 + $0x8] sm:$0xff]
    %v245 = vld [vmem:[#allocation2 + $0x10] sm:$0xff]
    %v246 = vld [vmem:[#allocation2 + $0x18] sm:$0xff]
    %v247 = vld [vmem:[#allocation2 + $0x20] sm:$0xff]
    %v248 = vld [vmem:[#allocation2 + $0x28] sm:$0xff]
    %v249 = vld [vmem:[#allocation2 + $0x30] sm:$0xff]
    %v250 = vld [vmem:[#allocation2 + $0x38] sm:$0xff]
    %v251 = vld [vmem:[#allocation2 + $0x40] sm:$0xff]
    %v252 = vld [vmem:[#allocation2 + $0x48] sm:$0xff]
    %v253 = vld [vmem:[#allocation2 + $0x50] sm:$0xff]
    %v254 = vld [vmem:[#allocation2 + $0x58] sm:$0xff]
    %v255 = vld [vmem:[#allocation2 + $0x60] sm:$0xff]
    %v256 = vld [vmem:[#allocation2 + $0x68] sm:$0xff]
    %v257 = vld [vmem:[#allocation2 + $0x70] sm:$0xff]
    %v258 = vld [vmem:[#allocation2 + $0x78] sm:$0xff]
    %v259 = vld [vmem:[#allocation2 + $0x80] sm:$0xff]
    %v260 = vld [vmem:[#allocation2 + $0x88] sm:$0xff]
    %v261 = vld [vmem:[#allocation2 + $0x90] sm:$0xff]
    %v262 = vld [vmem:[#allocation2 + $0x98] sm:$0xff]
    %v263 = vld [vmem:[#allocation2 + $0xa0] sm:$0xff]
    %v264 = vld [vmem:[#allocation2 + $0xa8] sm:$0xff]
    %v265 = vld [vmem:[#allocation2 + $0xb0] sm:$0xff]
    %v266 = vld [vmem:[#allocation2 + $0xb8] sm:$0xff]
    %v267 = vld [vmem:[#allocation2 + $0xc0] sm:$0xff]
    %v268 = vld [vmem:[#allocation2 + $0xc8] sm:$0xff]
    %v269 = vld [vmem:[#allocation2 + $0xd0] sm:$0xff]
    %v270 = vld [vmem:[#allocation2 + $0xd8] sm:$0xff]
    %v271 = vld [vmem:[#allocation2 + $0xe0] sm:$0xff]
    %v272 = vld [vmem:[#allocation2 + $0xe8] sm:$0xff]
    %v273 = vld [vmem:[#allocation2 + $0xf0] sm:$0xff]
    %v274 = vld [vmem:[#allocation2 + $0xf8] sm:$0xff]
    %v275 = vld [vmem:[#allocation2 + $0x100] sm:$0xff]
    %v276 = vld [vmem:[#allocation2 + $0x108] sm:$0xff]
    %v277 = vld [vmem:[#allocation2 + $0x110] sm:$0xff]
    %v278 = vld [vmem:[#allocation2 + $0x118] sm:$0xff]
    %v279 = vld [vmem:[#allocation2 + $0x120] sm:$0xff]
    %v280 = vld [vmem:[#allocation2 + $0x128] sm:$0xff]
    %v281 = vld [vmem:[#allocation2 + $0x130] sm:$0xff]
    %v282 = vld [vmem:[#allocation2 + $0x138] sm:$0xff]
    %v283 = vld [vmem:[#allocation2 + $0x140] sm:$0xff]
    %v284 = vld [vmem:[#allocation2 + $0x148] sm:$0xff]
    %v285 = vld [vmem:[#allocation2 + $0x150] sm:$0xff]
    %v286 = vld [vmem:[#allocation2 + $0x158] sm:$0xff]
    %v287 = vld [vmem:[#allocation2 + $0x160] sm:$0xff]
    %v288 = vld [vmem:[#allocation2 + $0x168] sm:$0xff]
    %v289 = vld [vmem:[#allocation2 + $0x170] sm:$0xff]
    %v290 = vld [vmem:[#allocation2 + $0x178] sm:$0xff]
    %v291 = vld [vmem:[#allocation2 + $0x180] sm:$0xff]
    %v292 = vld [vmem:[#allocation2 + $0x188] sm:$0xff]
    %v293 = vld [vmem:[#allocation2 + $0x190] sm:$0xff]
    %v294 = vld [vmem:[#allocation2 + $0x198] sm:$0xff]
    %v295 = vld [vmem:[#allocation2 + $0x1a0] sm:$0xff]
    %v296 = vld [vmem:[#allocation2 + $0x1a8] sm:$0xff]
    %v297 = vld [vmem:[#allocation2 + $0x1b0] sm:$0xff]
    %v298 = vld [vmem:[#allocation2 + $0x1b8] sm:$0xff]
    %v299 = vld [vmem:[#allocation2 + $0x1c0] sm:$0xff]
    %v300 = vld [vmem:[#allocation2 + $0x1c8] sm:$0xff]
    %v301 = vld [vmem:[#allocation2 + $0x1d0] sm:$0xff]
    %v302 = vld [vmem:[#allocation2 + $0x1d8] sm:$0xff]
    %v303 = vld [vmem:[#allocation2 + $0x1e0] sm:$0xff]
    %v304 = vld [vmem:[#allocation2 + $0x1e8] sm:$0xff]
    %v305 = vld [vmem:[#allocation2 + $0x1f0] sm:$0xff]
    %v306 = vld [vmem:[#allocation2 + $0x1f8] sm:$0xff]
    %v307 = vld [vmem:[%s2] sm:$0xf]
    %v309 = vlaneseq
    %v310 = vshrl.u32 %v309, 7
    %v311 = vsub.s32 0, %v310
    %v312 = vrot.slane %v307, %v311
    %v313 = vlaneseq
    %v314 = vshrl.u32 %v313, 7
    %v315 = vsub.s32 1, %v314
    %v316 = vrot.slane %v307, %v315
    %v317 = vlaneseq
    %v318 = vshrl.u32 %v317, 7
    %v319 = vsub.s32 2, %v318
    %v320 = vrot.slane %v307, %v319
    %v321 = vlaneseq
    %v322 = vshrl.u32 %v321, 7
    %v323 = vsub.s32 3, %v322
    %v324 = vrot.slane %v307, %v323
    %v361 = vlaneseq
    %v362 = vand.u32 %v361, 127
    %v363 = vlaneseq
    %v364 = vshrl.u32 %v363, 7
    %v365 = vsub.s32 %v362, %v364
    %v366 = vrot.slane %v211, %v365
    %v367 = vadd.s32 %v362, 4294967288
    %v368 = vlaneseq
    %v369 = vshrl.u32 %v368, 7
    %v370 = vsub.s32 %v367, %v369
    %v371 = vrot.slane %v212, %v370
    %vm372 = vcmask 130112
    %v373 = vsel %vm372, %v371, %v366
    %v374 = vadd.s32 %v362, 4294967280
    %v375 = vlaneseq
    %v376 = vshrl.u32 %v375, 7
    %v377 = vsub.s32 %v374, %v376
    %v378 = vrot.slane %v213, %v377
    %vm379 = vcmask 195712
    %v380 = vsel %vm379, %v378, %v373
    %v381 = vadd.s32 %v362, 4294967272
    %v382 = vlaneseq
    %v383 = vshrl.u32 %v382, 7
    %v384 = vsub.s32 %v381, %v383
    %v385 = vrot.slane %v214, %v384
    %vm386 = vcmask 261312
    %v387 = vsel %vm386, %v385, %v380
    %v388 = vadd.s32 %v362, 4294967264
    %v389 = vlaneseq
    %v390 = vshrl.u32 %v389, 7
    %v391 = vsub.s32 %v388, %v390
    %v392 = vrot.slane %v215, %v391
    %vm393 = vcmask 326912
    %v394 = vsel %vm393, %v392, %v387
    %v395 = vadd.s32 %v362, 4294967256
    %v396 = vlaneseq
    %v397 = vshrl.u32 %v396, 7
    %v398 = vsub.s32 %v395, %v397
    %v399 = vrot.slane %v216, %v398
    %vm400 = vcmask 392512
    %v401 = vsel %vm400, %v399, %v394
    %v402 = vadd.s32 %v362, 4294967248
    %v403 = vlaneseq
    %v404 = vshrl.u32 %v403, 7
    %v405 = vsub.s32 %v402, %v404
    %v406 = vrot.slane %v217, %v405
    %vm407 = vcmask 458112
    %v408 = vsel %vm407, %v406, %v401
    %v409 = vadd.s32 %v362, 4294967240
    %v410 = vlaneseq
    %v411 = vshrl.u32 %v410, 7
    %v412 = vsub.s32 %v409, %v411
    %v413 = vrot.slane %v218, %v412
    %vm414 = vcmask 523712
    %v415 = vsel %vm414, %v413, %v408
    %v416 = vadd.s32 %v362, 4294967232
    %v417 = vlaneseq
    %v418 = vshrl.u32 %v417, 7
    %v419 = vsub.s32 %v416, %v418
    %v420 = vrot.slane %v219, %v419
    %vm421 = vcmask 589312
    %v422 = vsel %vm421, %v420, %v415
    %v423 = vadd.s32 %v362, 4294967224
    %v424 = vlaneseq
    %v425 = vshrl.u32 %v424, 7
    %v426 = vsub.s32 %v423, %v425
    %v427 = vrot.slane %v220, %v426
    %vm428 = vcmask 654912
    %v429 = vsel %vm428, %v427, %v422
    %v430 = vadd.s32 %v362, 4294967216
    %v431 = vlaneseq
    %v432 = vshrl.u32 %v431, 7
    %v433 = vsub.s32 %v430, %v432
    %v434 = vrot.slane %v221, %v433
    %vm435 = vcmask 720512
    %v436 = vsel %vm435, %v434, %v429
    %v437 = vadd.s32 %v362, 4294967208
    %v438 = vlaneseq
    %v439 = vshrl.u32 %v438, 7
    %v440 = vsub.s32 %v437, %v439
    %v441 = vrot.slane %v222, %v440
    %vm442 = vcmask 786112
    %v443 = vsel %vm442, %v441, %v436
    %v444 = vadd.s32 %v362, 4294967200
    %v445 = vlaneseq
    %v446 = vshrl.u32 %v445, 7
    %v447 = vsub.s32 %v444, %v446
    %v448 = vrot.slane %v223, %v447
    %vm449 = vcmask 851712
    %v450 = vsel %vm449, %v448, %v443
    %v451 = vadd.s32 %v362, 4294967192
    %v452 = vlaneseq
    %v453 = vshrl.u32 %v452, 7
    %v454 = vsub.s32 %v451, %v453
    %v455 = vrot.slane %v224, %v454
    %vm456 = vcmask 917312
    %v457 = vsel %vm456, %v455, %v450
    %v458 = vadd.s32 %v362, 4294967184
    %v459 = vlaneseq
    %v460 = vshrl.u32 %v459, 7
    %v461 = vsub.s32 %v458, %v460
    %v462 = vrot.slane %v225, %v461
    %vm463 = vcmask 982912
    %v464 = vsel %vm463, %v462, %v457
    %v465 = vadd.s32 %v362, 4294967176
    %v466 = vlaneseq
    %v467 = vshrl.u32 %v466, 7
    %v468 = vsub.s32 %v465, %v467
    %v469 = vrot.slane %v226, %v468
    %vm470 = vcmask 1048512
    %v471 = vsel %vm470, %v469, %v464
    %v472 = vlaneseq
    %v473 = vshrl.u32 %v472, 7
    %v474 = vsub.s32 %v362, %v473
    %v475 = vrot.slane %v227, %v474
    %v476 = vlaneseq
    %v477 = vshrl.u32 %v476, 7
    %v478 = vsub.s32 %v367, %v477
    %v479 = vrot.slane %v228, %v478
    %v480 = vsel %vm372, %v479, %v475
    %v481 = vlaneseq
    %v482 = vshrl.u32 %v481, 7
    %v483 = vsub.s32 %v374, %v482
    %v484 = vrot.slane %v229, %v483
    %v485 = vsel %vm379, %v484, %v480
    %v486 = vlaneseq
    %v487 = vshrl.u32 %v486, 7
    %v488 = vsub.s32 %v381, %v487
    %v489 = vrot.slane %v230, %v488
    %v490 = vsel %vm386, %v489, %v485
    %v491 = vlaneseq
    %v492 = vshrl.u32 %v491, 7
    %v493 = vsub.s32 %v388, %v492
    %v494 = vrot.slane %v231, %v493
    %v495 = vsel %vm393, %v494, %v490
    %v496 = vlaneseq
    %v497 = vshrl.u32 %v496, 7
    %v498 = vsub.s32 %v395, %v497
    %v499 = vrot.slane %v232, %v498
    %v500 = vsel %vm400, %v499, %v495
    %v501 = vlaneseq
    %v502 = vshrl.u32 %v501, 7
    %v503 = vsub.s32 %v402, %v502
    %v504 = vrot.slane %v233, %v503
    %v505 = vsel %vm407, %v504, %v500
    %v506 = vlaneseq
    %v507 = vshrl.u32 %v506, 7
    %v508 = vsub.s32 %v409, %v507
    %v509 = vrot.slane %v234, %v508
    %v510 = vsel %vm414, %v509, %v505
    %v511 = vlaneseq
    %v512 = vshrl.u32 %v511, 7
    %v513 = vsub.s32 %v416, %v512
    %v514 = vrot.slane %v235, %v513
    %v515 = vsel %vm421, %v514, %v510
    %v516 = vlaneseq
    %v517 = vshrl.u32 %v516, 7
    %v518 = vsub.s32 %v423, %v517
    %v519 = vrot.slane %v236, %v518
    %v520 = vsel %vm428, %v519, %v515
    %v521 = vlaneseq
    %v522 = vshrl.u32 %v521, 7
    %v523 = vsub.s32 %v430, %v522
    %v524 = vrot.slane %v237, %v523
    %v525 = vsel %vm435, %v524, %v520
    %v526 = vlaneseq
    %v527 = vshrl.u32 %v526, 7
    %v528 = vsub.s32 %v437, %v527
    %v529 = vrot.slane %v238, %v528
    %v530 = vsel %vm442, %v529, %v525
    %v531 = vlaneseq
    %v532 = vshrl.u32 %v531, 7
    %v533 = vsub.s32 %v444, %v532
    %v534 = vrot.slane %v239, %v533
    %v535 = vsel %vm449, %v534, %v530
    %v536 = vlaneseq
    %v537 = vshrl.u32 %v536, 7
    %v538 = vsub.s32 %v451, %v537
    %v539 = vrot.slane %v240, %v538
    %v540 = vsel %vm456, %v539, %v535
    %v541 = vlaneseq
    %v542 = vshrl.u32 %v541, 7
    %v543 = vsub.s32 %v458, %v542
    %v544 = vrot.slane %v241, %v543
    %v545 = vsel %vm463, %v544, %v540
    %v546 = vlaneseq
    %v547 = vshrl.u32 %v546, 7
    %v548 = vsub.s32 %v465, %v547
    %v549 = vrot.slane %v242, %v548
    %v550 = vsel %vm470, %v549, %v545
    %vm551 = vcmask 1041409
    %v552 = vsel %vm551, %v550, %v471
    %554 = vmatprep.subr.mxu0 %v304
    %555 = vmatpush1.msra.mxu0 %v303
    %556 = vmatprep.subr.mxu0 %v300
    %557 = vmatpush1.msra.mxu0 %v299
    %558 = vmatprep.subr.mxu0 %v296
    %559 = vmatpush1.msra.mxu0 %v295
    %560 = vmatprep.subr.mxu0 %v292
    %561 = vmatpush1.msra.mxu0 %v291
    %562 = vmatprep.subr.mxu0 %v288
    %563 = vmatpush1.msra.mxu0 %v287
    %564 = vmatprep.subr.mxu0 %v284
    %565 = vmatpush1.msra.mxu0 %v283
    %566 = vmatprep.subr.mxu0 %v280
    %567 = vmatpush1.msra.mxu0 %v279
    %568 = vmatprep.subr.mxu0 %v276
    %569 = vmatpush1.msra.mxu0 %v275
    %570 = vmatprep.subr.mxu0 %v272
    %571 = vmatpush1.msra.mxu0 %v271
    %572 = vmatprep.subr.mxu0 %v268
    %573 = vmatpush1.msra.mxu0 %v267
    %574 = vmatprep.subr.mxu0 %v264
    %575 = vmatpush1.msra.mxu0 %v263
    %576 = vmatprep.subr.mxu0 %v260
    %577 = vmatpush1.msra.mxu0 %v259
    %578 = vmatprep.subr.mxu0 %v256
    %579 = vmatpush1.msra.mxu0 %v255
    %580 = vmatprep.subr.mxu0 %v252
    %581 = vmatpush1.msra.mxu0 %v251
    %582 = vmatprep.subr.mxu0 %v248
    %583 = vmatpush1.msra.mxu0 %v247
    %584 = vmatprep.subr.mxu0 %v244
    %585 = vmatpush1.msra.mxu0 %v243
    %586 = vmatprep.subr.mxu0 0.0
    %587 = vmatpush2.msra.mxu0 0.0
    %588 = vmatprep.subr.mxu0 0.0
    %589 = vmatpush2.msra.mxu0 0.0
    %590 = vmatprep.subr.mxu0 0.0
    %591 = vmatpush2.msra.mxu0 0.0
    %592 = vmatprep.subr.mxu0 0.0
    %593 = vmatpush2.msra.mxu0 0.0
    %594 = vmatprep.subr.mxu0 0.0
    %595 = vmatpush2.msra.mxu0 0.0
    %596 = vmatprep.subr.mxu0 0.0
    %597 = vmatpush2.msra.mxu0 0.0
    %598 = vmatprep.subr.mxu0 0.0
    %599 = vmatpush2.msra.mxu0 0.0
    %600 = vmatprep.subr.mxu0 0.0
    %601 = vmatpush2.msra.mxu0 0.0
    %602 = vmatprep.subr.mxu0 0.0
    %603 = vmatpush2.msra.mxu0 0.0
    %604 = vmatprep.subr.mxu0 0.0
    %605 = vmatpush2.msra.mxu0 0.0
    %606 = vmatprep.subr.mxu0 0.0
    %607 = vmatpush2.msra.mxu0 0.0
    %608 = vmatprep.subr.mxu0 0.0
    %609 = vmatpush2.msra.mxu0 0.0
    %610 = vmatprep.subr.mxu0 0.0
    %611 = vmatpush2.msra.mxu0 0.0
    %612 = vmatprep.subr.mxu0 0.0
    %613 = vmatpush2.msra.mxu0 0.0
    %614 = vmatprep.subr.mxu0 0.0
    %615 = vmatpush2.msra.mxu0 0.0
    %616 = vmatprep.subr.mxu0 0.0
    %617 = vmatpush2.msra.mxu0 0.0
    %618 = vmatprep.mubr.f32.mxu0 0.0
    %619 = vmatmul.mubr.f32.gmra.mxu0 %v552
    %v620 = vpop.f32.mrf.mxu0
    %v621 = vadd.f32 %v312, %v620
    %v622 = vpop.f32.mrf.mxu0
    %v623 = vadd.f32 %v316, %v622
    %624 = vdwg.mxu0
    %625 = vmatprep.subr.mxu0 %v306
    %626 = vmatpush1.msra.mxu0 %v305
    %627 = vmatprep.subr.mxu0 %v302
    %628 = vmatpush1.msra.mxu0 %v301
    %629 = vmatprep.subr.mxu0 %v298
    %630 = vmatpush1.msra.mxu0 %v297
    %631 = vmatprep.subr.mxu0 %v294
    %632 = vmatpush1.msra.mxu0 %v293
    %633 = vmatprep.subr.mxu0 %v290
    %634 = vmatpush1.msra.mxu0 %v289
    %635 = vmatprep.subr.mxu0 %v286
    %636 = vmatpush1.msra.mxu0 %v285
    %637 = vmatprep.subr.mxu0 %v282
    %638 = vmatpush1.msra.mxu0 %v281
    %639 = vmatprep.subr.mxu0 %v278
    %640 = vmatpush1.msra.mxu0 %v277
    %641 = vmatprep.subr.mxu0 %v274
    %642 = vmatpush1.msra.mxu0 %v273
    %643 = vmatprep.subr.mxu0 %v270
    %644 = vmatpush1.msra.mxu0 %v269
    %645 = vmatprep.subr.mxu0 %v266
    %646 = vmatpush1.msra.mxu0 %v265
    %647 = vmatprep.subr.mxu0 %v262
    %648 = vmatpush1.msra.mxu0 %v261
    %649 = vmatprep.subr.mxu0 %v258
    %650 = vmatpush1.msra.mxu0 %v257
    %651 = vmatprep.subr.mxu0 %v254
    %652 = vmatpush1.msra.mxu0 %v253
    %653 = vmatprep.subr.mxu0 %v250
    %654 = vmatpush1.msra.mxu0 %v249
    %655 = vmatprep.subr.mxu0 %v246
    %656 = vmatpush1.msra.mxu0 %v245
    %657 = vmatprep.subr.mxu0 0.0
    %658 = vmatpush2.msra.mxu0 0.0
    %659 = vmatprep.subr.mxu0 0.0
    %660 = vmatpush2.msra.mxu0 0.0
    %661 = vmatprep.subr.mxu0 0.0
    %662 = vmatpush2.msra.mxu0 0.0
    %663 = vmatprep.subr.mxu0 0.0
    %664 = vmatpush2.msra.mxu0 0.0
    %665 = vmatprep.subr.mxu0 0.0
    %666 = vmatpush2.msra.mxu0 0.0
    %667 = vmatprep.subr.mxu0 0.0
    %668 = vmatpush2.msra.mxu0 0.0
    %669 = vmatprep.subr.mxu0 0.0
    %670 = vmatpush2.msra.mxu0 0.0
    %671 = vmatprep.subr.mxu0 0.0
    %672 = vmatpush2.msra.mxu0 0.0
    %673 = vmatprep.subr.mxu0 0.0
    %674 = vmatpush2.msra.mxu0 0.0
    %675 = vmatprep.subr.mxu0 0.0
    %676 = vmatpush2.msra.mxu0 0.0
    %677 = vmatprep.subr.mxu0 0.0
    %678 = vmatpush2.msra.mxu0 0.0
    %679 = vmatprep.subr.mxu0 0.0
    %680 = vmatpush2.msra.mxu0 0.0
    %681 = vmatprep.subr.mxu0 0.0
    %682 = vmatpush2.msra.mxu0 0.0
    %683 = vmatprep.subr.mxu0 0.0
    %684 = vmatpush2.msra.mxu0 0.0
    %685 = vmatprep.subr.mxu0 0.0
    %686 = vmatpush2.msra.mxu0 0.0
    %687 = vmatprep.subr.mxu0 0.0
    %688 = vmatpush2.msra.mxu0 0.0
    %689 = vmatprep.mubr.f32.mxu0 0.0
    %690 = vmatmul.mubr.f32.gmra.mxu0 %v552
    %v691 = vpop.f32.mrf.mxu0
    %v692 = vadd.f32 %v320, %v691
    %v693 = vpop.f32.mrf.mxu0
    %v694 = vadd.f32 %v324, %v693
    %695 = vdwg.mxu0
    %v696 = vmax.f32 %v621, 0.0
    %v697 = vmax.f32 %v623, 0.0
    %v698 = vmax.f32 %v692, 0.0
    %v699 = vmax.f32 %v694, 0.0
    %v700 = vld [vmem:[#allocation5] sm:$0xff]
    %v701 = vld [vmem:[#allocation5 + $0x8] sm:$0xff]
    %v702 = vld [vmem:[#allocation5 + $0x10] sm:$0xff]
    %v703 = vld [vmem:[#allocation5 + $0x18] sm:$0xff]
    %v704 = vld [vmem:[#allocation5 + $0x20] sm:$0xff]
    %v705 = vld [vmem:[#allocation5 + $0x28] sm:$0xff]
    %v706 = vld [vmem:[#allocation5 + $0x30] sm:$0xff]
    %v707 = vld [vmem:[#allocation5 + $0x38] sm:$0xff]
    %v708 = vld [vmem:[#allocation5 + $0x40] sm:$0xff]
    %v709 = vld [vmem:[#allocation5 + $0x48] sm:$0xff]
    %v710 = vld [vmem:[#allocation5 + $0x50] sm:$0xff]
    %v711 = vld [vmem:[#allocation5 + $0x58] sm:$0xff]
    %v712 = vld [vmem:[#allocation5 + $0x60] sm:$0xff]
    %v713 = vld [vmem:[#allocation5 + $0x68] sm:$0xff]
    %v714 = vld [vmem:[#allocation5 + $0x70] sm:$0xff]
    %v715 = vld [vmem:[#allocation5 + $0x78] sm:$0xff]
    %v716 = vld [vmem:[#allocation5 + $0x80] sm:$0xff]
    %v717 = vld [vmem:[#allocation5 + $0x88] sm:$0xff]
    %v718 = vld [vmem:[#allocation5 + $0x90] sm:$0xff]
    %v719 = vld [vmem:[#allocation5 + $0x98] sm:$0xff]
    %v720 = vld [vmem:[#allocation5 + $0xa0] sm:$0xff]
    %v721 = vld [vmem:[#allocation5 + $0xa8] sm:$0xff]
    %v722 = vld [vmem:[#allocation5 + $0xb0] sm:$0xff]
    %v723 = vld [vmem:[#allocation5 + $0xb8] sm:$0xff]
    %v724 = vld [vmem:[#allocation5 + $0xc0] sm:$0xff]
    %v725 = vld [vmem:[#allocation5 + $0xc8] sm:$0xff]
    %v726 = vld [vmem:[#allocation5 + $0xd0] sm:$0xff]
    %v727 = vld [vmem:[#allocation5 + $0xd8] sm:$0xff]
    %v728 = vld [vmem:[#allocation5 + $0xe0] sm:$0xff]
    %v729 = vld [vmem:[#allocation5 + $0xe8] sm:$0xff]
    %v730 = vld [vmem:[#allocation5 + $0xf0] sm:$0xff]
    %v731 = vld [vmem:[#allocation5 + $0xf8] sm:$0xff]
    %v732 = vld [vmem:[#allocation5 + $0x100] sm:$0xff]
    %v733 = vld [vmem:[#allocation5 + $0x108] sm:$0xff]
    %v734 = vld [vmem:[#allocation5 + $0x110] sm:$0xff]
    %v735 = vld [vmem:[#allocation5 + $0x118] sm:$0xff]
    %v736 = vld [vmem:[#allocation5 + $0x120] sm:$0xff]
    %v737 = vld [vmem:[#allocation5 + $0x128] sm:$0xff]
    %v738 = vld [vmem:[#allocation5 + $0x130] sm:$0xff]
    %v739 = vld [vmem:[#allocation5 + $0x138] sm:$0xff]
    %v740 = vld [vmem:[#allocation5 + $0x140] sm:$0xff]
    %v741 = vld [vmem:[#allocation5 + $0x148] sm:$0xff]
    %v742 = vld [vmem:[#allocation5 + $0x150] sm:$0xff]
    %v743 = vld [vmem:[#allocation5 + $0x158] sm:$0xff]
    %v744 = vld [vmem:[#allocation5 + $0x160] sm:$0xff]
    %v745 = vld [vmem:[#allocation5 + $0x168] sm:$0xff]
    %v746 = vld [vmem:[#allocation5 + $0x170] sm:$0xff]
    %v747 = vld [vmem:[#allocation5 + $0x178] sm:$0xff]
    %v748 = vld [vmem:[#allocation5 + $0x180] sm:$0xff]
    %v749 = vld [vmem:[#allocation5 + $0x188] sm:$0xff]
    %v750 = vld [vmem:[#allocation5 + $0x190] sm:$0xff]
    %v751 = vld [vmem:[#allocation5 + $0x198] sm:$0xff]
    %v752 = vld [vmem:[#allocation5 + $0x1a0] sm:$0xff]
    %v753 = vld [vmem:[#allocation5 + $0x1a8] sm:$0xff]
    %v754 = vld [vmem:[#allocation5 + $0x1b0] sm:$0xff]
    %v755 = vld [vmem:[#allocation5 + $0x1b8] sm:$0xff]
    %v756 = vld [vmem:[#allocation5 + $0x1c0] sm:$0xff]
    %v757 = vld [vmem:[#allocation5 + $0x1c8] sm:$0xff]
    %v758 = vld [vmem:[#allocation5 + $0x1d0] sm:$0xff]
    %v759 = vld [vmem:[#allocation5 + $0x1d8] sm:$0xff]
    %v760 = vld [vmem:[#allocation5 + $0x1e0] sm:$0xff]
    %v761 = vld [vmem:[#allocation5 + $0x1e8] sm:$0xff]
    %v762 = vld [vmem:[#allocation5 + $0x1f0] sm:$0xff]
    %v763 = vld [vmem:[#allocation5 + $0x1f8] sm:$0xff]
    %v764 = vld [vmem:[%s4] sm:$0x1]
    %v766 = vlaneseq
    %v767 = vshrl.u32 %v766, 7
    %v768 = vsub.s32 0, %v767
    %v769 = vrot.slane %v764, %v768
    %771 = vmatprep.subr.mxu0 0.0
    %772 = vmatpush1.msra.mxu0 %v715
    %773 = vmatprep.subr.mxu0 0.0
    %774 = vmatpush1.msra.mxu0 %v714
    %775 = vmatprep.subr.mxu0 0.0
    %776 = vmatpush1.msra.mxu0 %v713
    %777 = vmatprep.subr.mxu0 0.0
    %778 = vmatpush1.msra.mxu0 %v712
    %779 = vmatprep.subr.mxu0 0.0
    %780 = vmatpush1.msra.mxu0 %v711
    %781 = vmatprep.subr.mxu0 0.0
    %782 = vmatpush1.msra.mxu0 %v710
    %783 = vmatprep.subr.mxu0 0.0
    %784 = vmatpush1.msra.mxu0 %v709
    %785 = vmatprep.subr.mxu0 0.0
    %786 = vmatpush1.msra.mxu0 %v708
    %787 = vmatprep.subr.mxu0 0.0
    %788 = vmatpush1.msra.mxu0 %v707
    %789 = vmatprep.subr.mxu0 0.0
    %790 = vmatpush1.msra.mxu0 %v706
    %791 = vmatprep.subr.mxu0 0.0
    %792 = vmatpush1.msra.mxu0 %v705
    %793 = vmatprep.subr.mxu0 0.0
    %794 = vmatpush1.msra.mxu0 %v704
    %795 = vmatprep.subr.mxu0 0.0
    %796 = vmatpush1.msra.mxu0 %v703
    %797 = vmatprep.subr.mxu0 0.0
    %798 = vmatpush1.msra.mxu0 %v702
    %799 = vmatprep.subr.mxu0 0.0
    %800 = vmatpush1.msra.mxu0 %v701
    %801 = vmatprep.subr.mxu0 0.0
    %802 = vmatpush1.msra.mxu0 %v700
    %803 = vmatprep.subr.mxu0 0.0
    %804 = vmatpush2.msra.mxu0 %v731
    %805 = vmatprep.subr.mxu0 0.0
    %806 = vmatpush2.msra.mxu0 %v730
    %807 = vmatprep.subr.mxu0 0.0
    %808 = vmatpush2.msra.mxu0 %v729
    %809 = vmatprep.subr.mxu0 0.0
    %810 = vmatpush2.msra.mxu0 %v728
    %811 = vmatprep.subr.mxu0 0.0
    %812 = vmatpush2.msra.mxu0 %v727
    %813 = vmatprep.subr.mxu0 0.0
    %814 = vmatpush2.msra.mxu0 %v726
    %815 = vmatprep.subr.mxu0 0.0
    %816 = vmatpush2.msra.mxu0 %v725
    %817 = vmatprep.subr.mxu0 0.0
    %818 = vmatpush2.msra.mxu0 %v724
    %819 = vmatprep.subr.mxu0 0.0
    %820 = vmatpush2.msra.mxu0 %v723
    %821 = vmatprep.subr.mxu0 0.0
    %822 = vmatpush2.msra.mxu0 %v722
    %823 = vmatprep.subr.mxu0 0.0
    %824 = vmatpush2.msra.mxu0 %v721
    %825 = vmatprep.subr.mxu0 0.0
    %826 = vmatpush2.msra.mxu0 %v720
    %827 = vmatprep.subr.mxu0 0.0
    %828 = vmatpush2.msra.mxu0 %v719
    %829 = vmatprep.subr.mxu0 0.0
    %830 = vmatpush2.msra.mxu0 %v718
    %831 = vmatprep.subr.mxu0 0.0
    %832 = vmatpush2.msra.mxu0 %v717
    %833 = vmatprep.subr.mxu0 0.0
    %834 = vmatpush2.msra.mxu0 %v716
    %835 = vmatprep.mubr.f32.mxu0 %v697
    %836 = vmatmul.mubr.f32.gmra.mxu0 %v696
    %v837 = vpop.f32.mrf.mxu0
    %v838 = vadd.f32 %v769, %v837
    %v839 = vpop.f32.mrf.mxu0
    %840 = vdwg.mxu0
    %841 = vmatprep.subr.mxu0 0.0
    %842 = vmatpush1.msra.mxu0 %v747
    %843 = vmatprep.subr.mxu0 0.0
    %844 = vmatpush1.msra.mxu0 %v746
    %845 = vmatprep.subr.mxu0 0.0
    %846 = vmatpush1.msra.mxu0 %v745
    %847 = vmatprep.subr.mxu0 0.0
    %848 = vmatpush1.msra.mxu0 %v744
    %849 = vmatprep.subr.mxu0 0.0
    %850 = vmatpush1.msra.mxu0 %v743
    %851 = vmatprep.subr.mxu0 0.0
    %852 = vmatpush1.msra.mxu0 %v742
    %853 = vmatprep.subr.mxu0 0.0
    %854 = vmatpush1.msra.mxu0 %v741
    %855 = vmatprep.subr.mxu0 0.0
    %856 = vmatpush1.msra.mxu0 %v740
    %857 = vmatprep.subr.mxu0 0.0
    %858 = vmatpush1.msra.mxu0 %v739
    %859 = vmatprep.subr.mxu0 0.0
    %860 = vmatpush1.msra.mxu0 %v738
    %861 = vmatprep.subr.mxu0 0.0
    %862 = vmatpush1.msra.mxu0 %v737
    %863 = vmatprep.subr.mxu0 0.0
    %864 = vmatpush1.msra.mxu0 %v736
    %865 = vmatprep.subr.mxu0 0.0
    %866 = vmatpush1.msra.mxu0 %v735
    %867 = vmatprep.subr.mxu0 0.0
    %868 = vmatpush1.msra.mxu0 %v734
    %869 = vmatprep.subr.mxu0 0.0
    %870 = vmatpush1.msra.mxu0 %v733
    %871 = vmatprep.subr.mxu0 0.0
    %872 = vmatpush1.msra.mxu0 %v732
    %873 = vmatprep.subr.mxu0 0.0
    %874 = vmatpush2.msra.mxu0 %v763
    %875 = vmatprep.subr.mxu0 0.0
    %876 = vmatpush2.msra.mxu0 %v762
    %877 = vmatprep.subr.mxu0 0.0
    %878 = vmatpush2.msra.mxu0 %v761
    %879 = vmatprep.subr.mxu0 0.0
    %880 = vmatpush2.msra.mxu0 %v760
    %881 = vmatprep.subr.mxu0 0.0
    %882 = vmatpush2.msra.mxu0 %v759
    %883 = vmatprep.subr.mxu0 0.0
    %884 = vmatpush2.msra.mxu0 %v758
    %885 = vmatprep.subr.mxu0 0.0
    %886 = vmatpush2.msra.mxu0 %v757
    %887 = vmatprep.subr.mxu0 0.0
    %888 = vmatpush2.msra.mxu0 %v756
    %889 = vmatprep.subr.mxu0 0.0
    %890 = vmatpush2.msra.mxu0 %v755
    %891 = vmatprep.subr.mxu0 0.0
    %892 = vmatpush2.msra.mxu0 %v754
    %893 = vmatprep.subr.mxu0 0.0
    %894 = vmatpush2.msra.mxu0 %v753
    %895 = vmatprep.subr.mxu0 0.0
    %896 = vmatpush2.msra.mxu0 %v752
    %897 = vmatprep.subr.mxu0 0.0
    %898 = vmatpush2.msra.mxu0 %v751
    %899 = vmatprep.subr.mxu0 0.0
    %900 = vmatpush2.msra.mxu0 %v750
    %901 = vmatprep.subr.mxu0 0.0
    %902 = vmatpush2.msra.mxu0 %v749
    %903 = vmatprep.subr.mxu0 0.0
    %904 = vmatpush2.msra.mxu0 %v748
    %905 = vmatprep.mubr.f32.mxu0 %v699
    %906 = vmatmul.mubr.f32.gmra.mxu0 %v698
    %v907 = vpop.f32.mrf.mxu0
    %v908 = vadd.f32 %v838, %v907
    %v909 = vpop.f32.mrf.mxu0
    %910 = vdwg.mxu0
    %911 = vst [vmem:[#allocation7] sm:$0x3] %v908
    // Predicated region
    $region30: #{tpu_custom_call.1} parent=1 // pred_check
      _
    $region31: #{tpu_custom_call.1} parent=1 // pred_check_branch
      %913 = sbr.rel (0) target = $region33
    $region32: #{tpu_custom_call.1} parent=1 // pred_region
      %s915 = ssub.s32 32, 32
      %916 = vsyncadd [#allocation4], %s915
      %s918 = sshll.u32 [#allocation7], 4
      %s919 = int_to_ptr.vmem [resolvable:$true] %s918
      %921 = dma.vmem_to_hbm [thread:$0]  %s919, 32, %s5, [#allocation4]
    $region33: #{tpu_custom_call.1} parent=1 // pred_fallthru
      _
    // Predicated region
    $region34: #{tpu_custom_call.1} parent=1 // pred_check
      _
    $region35: #{tpu_custom_call.1} parent=1 // pred_check_branch
      %923 = sbr.rel (0) target = $region37
    $region36: #{tpu_custom_call.1} parent=1 // pred_region
      %924 = dma.done [#allocation4], 32
    $region37: #{tpu_custom_call.1} parent=1 // pred_fallthru
      _
    %925 = vsyncpa [#allocation3], 1
    %926 = vsyncpa [#allocation6], 1
    %927 = vsyncpa [#allocation4], 1

</llo_original>
